<compile_context>
chip_gen: v7x
topology: tpu7x:2x2x1
jax: 0.10.0
libtpu: 0.0.40
codegen_flags: <defaults>
</compile_context>

<pallas_src>
import functools

import jax
import jax.numpy as jnp
import numpy as np
from jax.experimental import pallas as pl
from jax.experimental.pallas import tpu as pltpu

_MiB = 1 << 20


# -----------------------------------------------------------------------------
# Kernel
# -----------------------------------------------------------------------------
def _pack_kernel(lens_ref, feats_ref, out_ref, *, dim, flat_tile):
    """Zero elements whose sequence position >= lengths[r], per batch row.

    lens_ref  : VMEM (b_blk, 1)         int32  -- per-row valid lengths
    feats_ref : VMEM (b_blk, flat_tile) dtype  -- flattened feature tile
    out_ref   : VMEM (b_blk, flat_tile) dtype  -- zero-padded output tile
    """
    ftile = out_ref.shape[-1]
    # Global flattened column index for this flat-tile -> sequence position
    # (flat_idx // dim). Computed on a single (1, ftile) row and broadcast
    # over the b_blk sublanes.
    base = pl.program_id(1) * flat_tile
    flat_idx = base + jax.lax.broadcasted_iota(jnp.int32, (1, ftile), 1)
    if dim > 0 and (dim & (dim - 1)) == 0:
        pos = flat_idx >> (dim.bit_length() - 1)          # power-of-2: shift
    else:
        pos = flat_idx // dim
    mask = pos < lens_ref[...]                            # (b_blk, ftile)
    out_ref[...] = jnp.where(mask, feats_ref[...], jnp.zeros((), out_ref.dtype))


# -----------------------------------------------------------------------------
# Generation-aware budgets
# -----------------------------------------------------------------------------
def _tpu_budgets():
    """(tile_target_bytes, vmem_limit_bytes, pallas_min_bytes) for this chip."""
    try:
        info = pltpu.get_tpu_info()
        vmem_phys = int(getattr(info, "vmem_capacity_bytes", 64 * _MiB))
    except Exception:
        vmem_phys = 64 * _MiB                     # conservative (v7x-sized)
    # Explicit scoped-VMEM limit: 3/4 of physical (16/32 MiB defaults are far
    # too small for 8 MiB blocks), capped so we never ask for >96 MiB.
    vmem_limit = min((vmem_phys * 3) // 4, 96 * _MiB)
    # 4x block (double-buffered in + out) must fit under vmem_limit with slack.
    tile_target = min(8 * _MiB, vmem_limit // 6)
    # v7x (64 MiB VMEM, ~3.2 TB/s HBM): launch + one-step overhead dominates
    # small problems sooner, so keep more of them on the fused-XLA path.
    pallas_min = 4 * _MiB if vmem_phys <= 64 * _MiB else 1 * _MiB
    return tile_target, vmem_limit, pallas_min


# -----------------------------------------------------------------------------
# Wrapper / dispatcher
# -----------------------------------------------------------------------------
def _pack_xla(stacked_feats, lengths):
    """Fused XLA fallback for tiny or lane-unfriendly shapes."""
    _, max_len, _ = stacked_feats.shape
    pos = jnp.arange(max_len, dtype=jnp.int32)[None, :, None]
    keep = pos < lengths.astype(jnp.int32)[:, None, None]
    return jnp.where(keep, stacked_feats, jnp.zeros((), stacked_feats.dtype))


def pack_batched_features(stacked_feats, lengths, force_pallas=None,
                          tile_target_bytes=None):
    """Pallas implementation of DynamicFeatures.forward_batch packing.

    stacked_feats : (B, max_len, dim) -- per-env features written into a common
                    buffer; entries past lengths[i] are arbitrary garbage.
    lengths       : (B,) int -- valid rows per env (assumed in [0, max_len];
                    out-of-range values degrade gracefully: <=0 zeroes the row,
                    >max_len keeps the whole row -- never OOB).
    Returns (batched_features, lengths) like the PyTorch module.
    """
    B, max_len, dim = stacked_feats.shape
    lengths = jnp.asarray(lengths, jnp.int32)
    flat = max_len * dim
    itemsize = jnp.dtype(stacked_feats.dtype).itemsize
    total_bytes = B * flat * itemsize

    tile_target, vmem_limit, pallas_min = _tpu_budgets()
    if tile_target_bytes is not None:
        tile_target = int(tile_target_bytes)

    use_pallas = force_pallas
    if use_pallas is None:
        use_pallas = (flat % 128 == 0) and (total_bytes >= pallas_min)
    if use_pallas and flat % 128 != 0:
        # TODO(synk): pad / sub-tile the lane dim when max_len*dim % 128 != 0.
        use_pallas = False
    if not use_pallas:
        return _pack_xla(stacked_feats, lengths), lengths

    # --- block sizing -------------------------------------------------------
    # Native sublane tile for this dtype (f32:8, bf16:16, int8/fp8:32).
    sub = max(8, 32 // itemsize)
    bytes_per_row = flat * itemsize

    rows = tile_target // bytes_per_row
    if rows >= sub:
        # Whole rows fit the budget: tile the batch axis only.
        flat_tile = flat
        b_blk = min(B, (rows // sub) * sub)
    else:
        # Long rows: keep a minimal sublane-aligned batch block and tile the
        # flat axis in 128-lane multiples so VMEM never overflows.
        b_blk = min(B, sub)
        cols = max(1, tile_target // (b_blk * itemsize))
        flat_tile = max(128, (cols // 128) * 128)
        flat_tile = min(flat_tile, flat)

    # Megacore: never emit a 1-step grid when the batch is big enough to split
    # (v7x has 2 TensorCores; a single block streams on one core only).
    if pl.cdiv(B, b_blk) * pl.cdiv(flat, flat_tile) == 1 and B >= 2 * sub:
        half = pl.cdiv(B, 2)
        b_blk = ((half + sub - 1) // sub) * sub

    grid = (pl.cdiv(B, b_blk), pl.cdiv(flat, flat_tile))

    feats2d = stacked_feats.reshape(B, flat)   # lane-dense trailing axis
    lens2d = lengths.reshape(B, 1)

    cost = pl.CostEstimate(
        flops=B * flat,                                   # one select per elem
        transcendentals=0,
        bytes_accessed=2 * total_bytes + B * 4,           # read + write + lens
    )

    # TODO(synk): if the caller can donate stacked_feats, alias in/out and only
    # zero the invalid tail per row (scalar-prefetched lengths + manual DMA) to
    # cut HBM traffic ~2x; not done here because donation isn't guaranteed.
    out2d = pl.pallas_call(
        functools.partial(_pack_kernel, dim=dim, flat_tile=flat_tile),
        out_shape=jax.ShapeDtypeStruct((B, flat), stacked_feats.dtype),
        grid=grid,
        in_specs=[
            pl.BlockSpec((b_blk, 1), lambda i, j: (i, 0)),          # lengths col
            pl.BlockSpec((b_blk, flat_tile), lambda i, j: (i, j)),  # features
        ],
        out_specs=pl.BlockSpec((b_blk, flat_tile), lambda i, j: (i, j)),
        compiler_params=pltpu.CompilerParams(
            dimension_semantics=("parallel", "parallel"),
            vmem_limit_bytes=vmem_limit,
        ),
        cost_estimate=cost,
    )(lens2d, feats2d)
    return out2d.reshape(B, max_len, dim), lengths


def forward_single(batched_features, lengths, i):
    """DynamicFeatures.forward cached path:
    self._batched_features[i, :l, :].unsqueeze(0) -- pure glue (host-side slice,
    not jittable because of the data-dependent length)."""
    l = int(lengths[i])
    return batched_features[i, :l, :][None, :, :]


# -----------------------------------------------------------------------------
# Demo / correctness check
# -----------------------------------------------------------------------------
def _make_case(key, B, max_len, dim, lengths):
    k_feats, k_noise = jax.random.split(key)
    clean = jax.random.normal(k_feats, (B, max_len, dim), dtype=jnp.float32)
    garbage = 100.0 + jax.random.normal(k_noise, (B, max_len, dim), dtype=jnp.float32)
    pos = jnp.arange(max_len)[None, :, None]
    stacked = jnp.where(pos < lengths[:, None, None], clean, garbage)
    return stacked


def _reference(stacked, lengths):
    stacked_np = np.asarray(stacked)
    B, max_len, dim = stacked_np.shape
    ref = np.zeros((B, max_len, dim), dtype=stacked_np.dtype)
    for i in range(B):
        l = int(lengths[i])
        ref[i, :l, :] = stacked_np[i, :l, :]
    return ref


if __name__ == "__main__":
    key = jax.random.PRNGKey(0)
    k1, k2, k3, k4, k5 = jax.random.split(key, 5)

    # Case 1: small shape matching the module convention (B=2, seq=8, dim=32).
    B, max_len, dim = 2, 8, 32
    lengths = jnp.array([5, 8], dtype=jnp.int32)
    stacked = _make_case(k1, B, max_len, dim, lengths)

    batched, out_lengths = pack_batched_features(stacked, lengths, force_pallas=True)
    batched = jax.block_until_ready(batched)
    ref = _reference(stacked, lengths)
    np.testing.assert_allclose(np.asarray(batched), ref, rtol=0, atol=0)

    # Dispatcher picks the fused-XLA path at this tiny size; must match.
    batched_xla, _ = pack_batched_features(stacked, lengths)
    np.testing.assert_allclose(np.asarray(jax.block_until_ready(batched_xla)), ref,
                               rtol=0, atol=0)

    # forward() cached-slice path (glue): shape (1, l, dim).
    f0 = forward_single(batched, lengths, 0)
    assert f0.shape == (1, 5, dim)
    np.testing.assert_allclose(np.asarray(f0[0]), ref[0, :5, :])

    # Case 2: larger batch exercising the multi-block batch grid (>=2 blocks so
    # both v7x TensorCores stream) incl. a partial final block.
    B2, max_len2, dim2 = 48, 512, 32
    lengths2 = jax.random.randint(k2, (B2,), 1, max_len2 + 1, dtype=jnp.int32)
    stacked2 = _make_case(k3, B2, max_len2, dim2, lengths2)
    batched2, _ = pack_batched_features(stacked2, lengths2, force_pallas=True)
    batched2 = jax.block_until_ready(batched2)
    ref2 = _reference(stacked2, lengths2)
    np.testing.assert_allclose(np.asarray(batched2), ref2, rtol=0, atol=0)

    # Case 3: force the flat-axis tiling path (long rows vs a tiny tile budget)
    # to exercise the 2-D grid / global-position mask.
    B3, max_len3, dim3 = 8, 64, 32
    lengths3 = jax.random.randint(k4, (B3,), 0, max_len3 + 1, dtype=jnp.int32)
    stacked3 = _make_case(k5, B3, max_len3, dim3, lengths3)
    batched3, _ = pack_batched_features(stacked3, lengths3, force_pallas=True,
                                        tile_target_bytes=16 * 1024)
    batched3 = jax.block_until_ready(batched3)
    ref3 = _reference(stacked3, lengths3)
    np.testing.assert_allclose(np.asarray(batched3), ref3, rtol=0, atol=0)

    print("KERNEL_OK")
</pallas_src>

<mosaic_0001>
module attributes {stable_mosaic.version = 11 : i64} {
  func.func @_pack_kernel(%arg0: i32, %arg1: i32, %arg2: memref<2x1xi32, #tpu.memory_space<vmem>>, %arg3: memref<2x256xf32, #tpu.memory_space<vmem>>, %arg4: memref<2x256xf32, #tpu.memory_space<vmem>>) attributes {dimension_semantics = [#tpu.dimension_semantics<parallel>, #tpu.dimension_semantics<parallel>], iteration_bounds = array<i64: 1, 1>, scalar_prefetch = 0 : i64, scratch_operands = 0 : i64, tpu.core_type = #tpu.core_type<tc>, window_params = [{transform_indices = @transform_0, window_bounds = array<i64: 2, 1>}, {transform_indices = @transform_1, window_bounds = array<i64: 2, 256>}, {transform_indices = @transform_2, window_bounds = array<i64: 2, 256>}]} {
    %c256_i32 = arith.constant 256 : i32
    %0 = arith.muli %arg1, %c256_i32 : i32
    %1 = tpu.iota {dimensions = array<i32: 1>} : vector<1x256xi32>
    %2 = vector.broadcast %0 : i32 to vector<1x256xi32>
    %3 = arith.addi %2, %1 : vector<1x256xi32>
    %c5_i32 = arith.constant 5 : i32
    %4 = vector.broadcast %c5_i32 : i32 to vector<1x256xi32>
    %5 = arith.shrsi %3, %4 : vector<1x256xi32>
    %c0 = arith.constant 0 : index
    %c0_0 = arith.constant 0 : index
    %6 = vector.load %arg2[%c0, %c0_0] : memref<2x1xi32, #tpu.memory_space<vmem>>, vector<2x1xi32>
    %7 = vector.broadcast %5 : vector<1x256xi32> to vector<2x256xi32>
    %8 = vector.broadcast %6 : vector<2x1xi32> to vector<2x256xi32>
    %9 = arith.cmpi slt, %7, %8 : vector<2x256xi32>
    %c0_1 = arith.constant 0 : index
    %c0_2 = arith.constant 0 : index
    %10 = vector.load %arg3[%c0_1, %c0_2] : memref<2x256xf32, #tpu.memory_space<vmem>>, vector<2x256xf32>
    %cst = arith.constant 0.000000e+00 : f32
    %11 = vector.broadcast %cst : f32 to vector<2x256xf32>
    %12 = arith.select %9, %10, %11 : vector<2x256xi1>, vector<2x256xf32>
    %c0_3 = arith.constant 0 : index
    %c0_4 = arith.constant 0 : index
    %13 = vector.load %arg4[%c0_3, %c0_4] : memref<2x256xf32, #tpu.memory_space<vmem>>, vector<2x256xf32>
    tpu.vector_store %arg4[%c0_3, %c0_4], %12 {strides = array<i32>} : memref<2x256xf32, #tpu.memory_space<vmem>>, vector<2x256xf32>,
    return
  }
  func.func @transform_0(%arg0: i32, %arg1: i32) -> (i32, i32) {
    %c0_i32 = arith.constant 0 : i32
    %c0_i32_0 = arith.constant 0 : i32
    return %arg0, %c0_i32 : i32, i32
  }
  func.func @transform_1(%arg0: i32, %arg1: i32) -> (i32, i32) {
    %c0_i32 = arith.constant 0 : i32
    return %arg0, %arg1 : i32, i32
  }
  func.func @transform_2(%arg0: i32, %arg1: i32) -> (i32, i32) {
    %c0_i32 = arith.constant 0 : i32
    return %arg0, %arg1 : i32, i32
  }
}

</mosaic_0001>

<llo_original>
// kernel: tpu_custom_call.1
$region0: #{tpu_custom_call.1}
  #allocation0 [shape = 'u32[]', space=smem, size = 0x4, offset = 0x4, fixed_abs, tag = 'smem constant byte address 0x4 - core index']
  #allocation1 [shape = 'u32[144,128]{1,0:T(1,128)}', space=vmem, size = 0x12000, scoped, tag = 'internal scratch']
  %s0 = inlined_call_operand.vmem [shape: s32[2,1], index: 0, kind: input, shape index: {}]
  %s1 = inlined_call_operand.vmem [shape: f32[2,256], index: 1, kind: input, shape index: {}]
  %s2 = inlined_call_operand.hbm [shape: f32[2,256], index: 2, kind: output, shape index: {}]
  %s3 = sld [smem:[#allocation0]]
  $region18: #{tpu_custom_call.1} parent=0
    _
  %s5 = ssub.s32 1, %s3
  %s6 = scalar_select 0, %s5, %s3
  $region1: #{tpu_custom_call.1} parent=0
    #allocation2 [shape = 'u8[2048]{0}', space=vmem, size = 0x800, scoped, tag = 'output window, operand 0, single buffered']
    #allocation3 [shape = 's32[1]{0}', space=sflag, size = 0x4, scoped, tag = 'scoped memory for tpu_custom_call.1']
    %7 = vsyncpa [#allocation3], 0
    // Predicated region
    $region2: #{tpu_custom_call.1} parent=1 // pred_check
      _
    $region3: #{tpu_custom_call.1} parent=1 // pred_check_branch
      %9 = sbr.rel (0) target = $region5
    $region4: #{tpu_custom_call.1} parent=1 // pred_region
      _
    $region5: #{tpu_custom_call.1} parent=1 // pred_fallthru
      _
    // Predicated region
    $region6: #{tpu_custom_call.1} parent=1 // pred_check
      _
    $region7: #{tpu_custom_call.1} parent=1 // pred_check_branch
      %11 = sbr.rel (0) target = $region9
    $region8: #{tpu_custom_call.1} parent=1 // pred_region
      _
    $region9: #{tpu_custom_call.1} parent=1 // pred_fallthru
      _
    %s12 = smul.u32 0, 256
    %v13 = vlaneseq
    %v14 = vand.u32 %v13, 127
    %v15 = vadd.s32 %v14, 128
    %v16 = vstv %s12
    %v17 = vadd.s32 %v16, %v14
    %v18 = vadd.s32 %v16, %v15
    %v19 = vshra.s32 %v17, 5
    %v20 = vshra.s32 %v18, 5
    %v21 = vld [vmem:[%s0] sm:$0x3]
    %22 = vset.pattern.permute.xlu0 0
    %23 = vperm.xlu0 %22, %v21
    %v24 = vpop.permute.xlu0 %23
    %vm25 = vcmp.lt.s32.totalorder %v19, %v24
    %vm26 = vcmp.lt.s32.totalorder %v20, %v24
    %v27 = vld [vmem:[%s1] sm:$0xf]
    %v30 = vunpack.c.l.s4 1983009808
    %v31 = vunpack.c.0.s8 %v30
    %v32 = vlaneseq
    %v33 = vshrl.u32 %v32, 7
    %v34 = vsub.s32 %v31, %v33
    %v35 = vrot.slane %v27, %v34
    %v36 = vcombine.high %v35, %v35
    %v39 = vsel %vm25, %v35, 0.0
    %v40 = vsel %vm26, %v36, 0.0
    %v43 = vcombine.low %v39, %v40
    %v45 = vunpack.c.l.s4 1983009808
    %v46 = vunpack.c.0.s8 %v45
    %v47 = vlaneseq
    %v48 = vshrl.u32 %v47, 7
    %v49 = vsub.s32 %v46, %v48
    %v50 = vrot.slane %v43, %v49
    %52 = vst [vmem:[#allocation2] sm:$0xf] %v50
    // Predicated region
    $region10: #{tpu_custom_call.1} parent=1 // pred_check
      _
    $region11: #{tpu_custom_call.1} parent=1 // pred_check_branch
      %54 = sbr.rel (0) target = $region13
    $region12: #{tpu_custom_call.1} parent=1 // pred_region
      %s56 = ssub.s32 64, 64
      %57 = vsyncadd [#allocation3], %s56
      %s59 = sshll.u32 [#allocation2], 4
      %s60 = int_to_ptr.vmem [resolvable:$true] %s59
      %62 = dma.vmem_to_hbm [thread:$0]  %s60, 64, %s2, [#allocation3]
    $region13: #{tpu_custom_call.1} parent=1 // pred_fallthru
      _
    // Predicated region
    $region14: #{tpu_custom_call.1} parent=1 // pred_check
      _
    $region15: #{tpu_custom_call.1} parent=1 // pred_check_branch
      %64 = sbr.rel (0) target = $region17
    $region16: #{tpu_custom_call.1} parent=1 // pred_region
      %65 = dma.done [#allocation3], 64
    $region17: #{tpu_custom_call.1} parent=1 // pred_fallthru
      _
    %66 = vsyncpa [#allocation3], 1

</llo_original>
